<compile_context>
chip_gen: v7x
topology: tpu7x:2x2x1
jax: 0.10.0
libtpu: 0.0.40
codegen_flags: <defaults>
</compile_context>

<pallas_src>
import jax
import jax.numpy as jnp
from jax.experimental import pallas as pl
from jax.experimental.pallas import tpu as pltpu

_LANE = 128


def _round_up(x, m):
    return (x + m - 1) // m * m


# ---------------------------------------------------------------------------
# Hardware-generation detection (best effort; conservative v7x fallback).
# ---------------------------------------------------------------------------
def _tpu_caps():
    vmem = None
    try:
        vmem = int(pltpu.get_tpu_info().vmem_capacity_bytes)
    except Exception:
        vmem = None

    kind = ""
    try:
        kind = jax.devices()[0].device_kind.lower()
    except Exception:
        kind = ""

    multi_tc = "v7" in kind                                   # v7x: 2 TensorCores/chip
    small_mxu = ("v5e" in kind) or ("v5 lite" in kind)        # v5e: 128x128 MXU

    if vmem is None:
        if multi_tc:
            vmem = 64 << 20
        elif kind:
            vmem = 128 << 20
        else:
            vmem = 64 << 20                                   # unknown -> conservative

    # Headroom below physical VMEM for compiler-internal buffers.
    if vmem <= (64 << 20):
        limit = vmem - (8 << 20)                              # v7x: 56 MiB
    else:
        limit = min(vmem - (16 << 20), 112 << 20)             # v5e/v6e: ~112 MiB
    budget = limit - (4 << 20)
    return {
        "vmem_limit": int(limit),
        "budget": int(budget),
        "multi_tc": multi_tc,
        "small_mxu": small_mxu,
    }


# ---------------------------------------------------------------------------
# Kernel body
# ---------------------------------------------------------------------------
def _projection_kernel(q_ref, r_ref,
                       w1_ref, b1_ref,
                       w2_ref, b2_ref,
                       w0_ref, b0_ref,
                       o_ref):
    # Elementwise add in f32 (v5e VPU is f32-only); cast only at the MXU inputs.
    x = q_ref[...].astype(jnp.float32) + r_ref[...].astype(jnp.float32)

    h = jnp.dot(x.astype(w1_ref.dtype), w1_ref[...],
                preferred_element_type=jnp.float32) + b1_ref[...]
    h = jnp.maximum(h, 0.0)                                   # relu(layer1)

    h = jnp.dot(h.astype(w2_ref.dtype), w2_ref[...],
                preferred_element_type=jnp.float32) + b2_ref[...]
    h = jnp.maximum(h, 0.0)                                   # relu(layer2)

    y = jnp.dot(h.astype(w0_ref.dtype), w0_ref[...],
                preferred_element_type=jnp.float32) + b0_ref[...]   # layer0, no relu
    o_ref[...] = y.astype(o_ref.dtype)


# ---------------------------------------------------------------------------
# One-time parameter preparation (pad H -> Hp, cast weights to matmul dtype).
# Call this once and reuse the result across forward calls.
# ---------------------------------------------------------------------------
def prepare_projection_params(params, matmul_dtype=jnp.bfloat16):
    D, H = params["w1"].shape
    Hp = _round_up(H, _LANE)

    def pad_to(a, rows, cols, dtype):
        return jnp.pad(a, ((0, rows - a.shape[0]),
                           (0, cols - a.shape[1]))).astype(dtype)

    return {
        "D": D, "H": H, "Hp": Hp,
        "matmul_dtype": jnp.dtype(matmul_dtype),
        "w1": pad_to(params["w1"], D, Hp, matmul_dtype),      # (D,  Hp)
        "b1": pad_to(params["b1"], 1, Hp, jnp.float32),       # (1,  Hp)
        "w2": pad_to(params["w2"], Hp, Hp, matmul_dtype),     # (Hp, Hp)
        "b2": pad_to(params["b2"], 1, Hp, jnp.float32),       # (1,  Hp)
        "w0": pad_to(params["w0"], Hp, D, matmul_dtype),      # (Hp, D)  output dim unpadded
        "b0": pad_to(params["b0"], 1, D, jnp.float32),        # (1,  D)
    }


# ---------------------------------------------------------------------------
# Tile-size heuristics
# ---------------------------------------------------------------------------
def _vmem_estimate(tile_b, D, Hp, act_bytes, w_bytes):
    weights = (D * Hp + Hp * Hp + Hp * D) * w_bytes           # single-buffered residents
    biases = (2 * Hp + D) * 4
    acts_in = 2 * tile_b * D * act_bytes * 2                  # q, r tiles (double-buffered)
    acts_out = tile_b * D * act_bytes * 2                     # out tile (double-buffered)
    # f32 temporaries + MXU-operand cast copies inside the body
    compute = tile_b * D * (4 + w_bytes) \
        + 2 * tile_b * Hp * (4 + w_bytes) \
        + tile_b * D * 4
    scratch = 2 << 20                                         # compiler-internal scratch
    return weights + biases + acts_in + acts_out + compute + scratch


def _pick_tile_b(B, D, Hp, act_bytes, w_bytes, budget, *, small_mxu, multi_tc):
    min_tile = 128 if small_mxu else 256                      # v5e vs v6e/v7x MXU height
    if B <= min_tile:
        return B                                              # single grid step; block == full batch

    cands = [c for c in (2048, 1024, 512, 256, 128)
             if c >= min_tile and c <= B]
    fitting = [c for c in cands
               if _vmem_estimate(c, D, Hp, act_bytes, w_bytes) <= budget]
    if not fitting:
        # TODO(synk): when resident weights blow the budget, tile the hidden dim
        # (grid K-axis + f32 accumulator) instead of shrinking the batch tile.
        fitting = [min_tile]

    if multi_tc:
        even = [c for c in fitting if (-(-B // c)) % 2 == 0]  # prefer even step count on v7x
        if even:
            return even[0]
    return fitting[0]


# ---------------------------------------------------------------------------
# Forward wrapper
# ---------------------------------------------------------------------------
def projection_forward(q, r, prepared, *, tile_b=None):
    """q, r: (B, D). `prepared` from prepare_projection_params()."""
    B, D = q.shape
    assert D == prepared["D"], "feature dim mismatch with prepared params"
    H, Hp = prepared["H"], prepared["Hp"]
    mm_dtype = prepared["matmul_dtype"]
    out_dtype = q.dtype
    caps = _tpu_caps()

    # Fast path: DMA the activation streams in bf16 (cast fuses into producers
    # under jit); exact path keeps f32 end-to-end.
    act_dtype = mm_dtype if mm_dtype == jnp.dtype(jnp.bfloat16) else q.dtype
    q_in = q.astype(act_dtype)
    r_in = r.astype(act_dtype)
    act_bytes = jnp.dtype(act_dtype).itemsize
    w_bytes = jnp.dtype(mm_dtype).itemsize

    if tile_b is None:
        tile_b = _pick_tile_b(B, D, Hp, act_bytes, w_bytes, caps["budget"],
                              small_mxu=caps["small_mxu"],
                              multi_tc=caps["multi_tc"])

    # Ragged batch: pad with zero rows up to a multiple of tile_b (harmless,
    # sliced off at the end) instead of shrinking the tile.
    B_pad = _round_up(B, tile_b)
    if B_pad != B:
        q_in = jnp.pad(q_in, ((0, B_pad - B), (0, 0)))
        r_in = jnp.pad(r_in, ((0, B_pad - B), (0, 0)))
    grid = (B_pad // tile_b,)

    act_spec = pl.BlockSpec((tile_b, D), lambda i: (i, 0))

    # Weights/biases never change across the grid -> single-buffered residents.
    def resident(shape):
        return pl.BlockSpec(shape, lambda i: (0, 0), pipeline_mode=pl.Buffered(1))

    # Advisory cost estimate in REAL (unpadded) dims.
    flops = 2 * B * (D * H + H * H + H * D)
    bytes_accessed = 2 * B * D * act_bytes + B * D * jnp.dtype(out_dtype).itemsize \
        + (D * Hp + Hp * Hp + Hp * D) * w_bytes + (2 * Hp + D) * 4

    out_p = pl.pallas_call(
        _projection_kernel,
        out_shape=jax.ShapeDtypeStruct((B_pad, D), out_dtype),
        grid_spec=pltpu.PrefetchScalarGridSpec(
            num_scalar_prefetch=0,
            grid=grid,
            in_specs=[
                act_spec,                       # q
                act_spec,                       # r
                resident((D, Hp)),              # w1
                resident((1, Hp)),              # b1
                resident((Hp, Hp)),             # w2
                resident((1, Hp)),              # b2
                resident((Hp, D)),              # w0
                resident((1, D)),               # b0
            ],
            out_specs=pl.BlockSpec((tile_b, D), lambda i: (i, 0)),
        ),
        compiler_params=pltpu.CompilerParams(
            dimension_semantics=("parallel",),
            vmem_limit_bytes=caps["vmem_limit"],
        ),
        cost_estimate=pl.CostEstimate(
            flops=flops, transcendentals=0, bytes_accessed=bytes_accessed),
    )(q_in, r_in,
      prepared["w1"], prepared["b1"],
      prepared["w2"], prepared["b2"],
      prepared["w0"], prepared["b0"])

    return out_p[:B] if B_pad != B else out_p


# ---------------------------------------------------------------------------
# Init (matching PyTorch: xavier_uniform_ weights, default nn.Linear bias init)
# ---------------------------------------------------------------------------
def _xavier_uniform(key, fan_in, fan_out, dtype=jnp.float32):
    limit = jnp.sqrt(6.0 / (fan_in + fan_out))
    # stored as (in, out): transpose of PyTorch's (out, in), same distribution.
    return jax.random.uniform(key, (fan_in, fan_out), dtype, -limit, limit)


def _linear_bias(key, fan_in, fan_out, dtype=jnp.float32):
    bound = 1.0 / jnp.sqrt(jnp.float32(fan_in))
    return jax.random.uniform(key, (1, fan_out), dtype, -bound, bound)


def init_projection_params(key, dim, hidden_dim):
    k = jax.random.split(key, 6)
    return {
        "w1": _xavier_uniform(k[0], dim, hidden_dim),          # layer1: dim -> hidden
        "b1": _linear_bias(k[1], dim, hidden_dim),
        "w2": _xavier_uniform(k[2], hidden_dim, hidden_dim),   # layer2: hidden -> hidden
        "b2": _linear_bias(k[3], hidden_dim, hidden_dim),
        "w0": _xavier_uniform(k[4], hidden_dim, dim),          # layer0: hidden -> dim
        "b0": _linear_bias(k[5], hidden_dim, dim),
    }


def projection_ref(q, r, params):
    # Pure-JAX f32 reference.
    x = q + r
    x = jnp.maximum(x @ params["w1"] + params["b1"], 0.0)
    x = jnp.maximum(x @ params["w2"] + params["b2"], 0.0)
    return x @ params["w0"] + params["b0"]


if __name__ == "__main__":
    key = jax.random.PRNGKey(0)
    kq, kr, kp = jax.random.split(key, 3)

    # Small shapes consistent with Projection(dim=32, hidden_dim=64, num_layers=2)
    B, D, H = 16, 32, 64
    q = jax.random.normal(kq, (B, D), jnp.float32)
    r = jax.random.normal(kr, (B, D), jnp.float32)
    params = init_projection_params(kp, D, H)

    ref = projection_ref(q, r, params)

    # Exact path: f32 matmul operands + f32 activation DMA (tight tolerance).
    prepared_f32 = prepare_projection_params(params, matmul_dtype=jnp.float32)
    out_f32 = jax.block_until_ready(projection_forward(q, r, prepared_f32))
    assert out_f32.shape == (B, D)
    assert jnp.allclose(out_f32, ref, atol=1e-5, rtol=1e-5), "f32 path mismatch"

    # Fast path: bf16 MXU operands + bf16 activation DMA, f32 accumulation.
    prepared_bf16 = prepare_projection_params(params, matmul_dtype=jnp.bfloat16)
    out_bf16 = jax.block_until_ready(projection_forward(q, r, prepared_bf16))
    assert out_bf16.shape == (B, D)
    assert jnp.allclose(out_bf16, ref, atol=1e-1, rtol=5e-2), "bf16 path mismatch"

    print("KERNEL_OK")
</pallas_src>

<mosaic_0001>
module attributes {stable_mosaic.version = 11 : i64} {
  func.func @_projection_kernel(%arg0: i32, %arg1: memref<16x32xf32, #tpu.memory_space<vmem>>, %arg2: memref<16x32xf32, #tpu.memory_space<vmem>>, %arg3: memref<32x128xf32, #tpu.memory_space<vmem>>, %arg4: memref<1x128xf32, #tpu.memory_space<vmem>>, %arg5: memref<128x128xf32, #tpu.memory_space<vmem>>, %arg6: memref<1x128xf32, #tpu.memory_space<vmem>>, %arg7: memref<128x32xf32, #tpu.memory_space<vmem>>, %arg8: memref<1x32xf32, #tpu.memory_space<vmem>>, %arg9: memref<16x32xf32, #tpu.memory_space<vmem>>) attributes {dimension_semantics = [#tpu.dimension_semantics<parallel>], iteration_bounds = array<i64: 1>, scalar_prefetch = 0 : i64, scratch_operands = 0 : i64, tpu.core_type = #tpu.core_type<tc>, window_params = [{transform_indices = @transform_0, window_bounds = array<i64: 16, 32>}, {transform_indices = @transform_1, window_bounds = array<i64: 16, 32>}, {pipeline_mode = #tpu.pipeline_mode<synchronous>, transform_indices = @transform_2, window_bounds = array<i64: 32, 128>}, {pipeline_mode = #tpu.pipeline_mode<synchronous>, transform_indices = @transform_3, window_bounds = array<i64: 1, 128>}, {pipeline_mode = #tpu.pipeline_mode<synchronous>, transform_indices = @transform_4, window_bounds = array<i64: 128, 128>}, {pipeline_mode = #tpu.pipeline_mode<synchronous>, transform_indices = @transform_5, window_bounds = array<i64: 1, 128>}, {pipeline_mode = #tpu.pipeline_mode<synchronous>, transform_indices = @transform_6, window_bounds = array<i64: 128, 32>}, {pipeline_mode = #tpu.pipeline_mode<synchronous>, transform_indices = @transform_7, window_bounds = array<i64: 1, 32>}, {transform_indices = @transform_8, window_bounds = array<i64: 16, 32>}]} {
    %c0 = arith.constant 0 : index
    %c0_0 = arith.constant 0 : index
    %0 = vector.load %arg1[%c0, %c0_0] : memref<16x32xf32, #tpu.memory_space<vmem>>, vector<16x32xf32>
    %c0_1 = arith.constant 0 : index
    %c0_2 = arith.constant 0 : index
    %1 = vector.load %arg2[%c0_1, %c0_2] : memref<16x32xf32, #tpu.memory_space<vmem>>, vector<16x32xf32>
    %2 = arith.addf %0, %1 : vector<16x32xf32>
    %c0_3 = arith.constant 0 : index
    %c0_4 = arith.constant 0 : index
    %3 = vector.load %arg3[%c0_3, %c0_4] : memref<32x128xf32, #tpu.memory_space<vmem>>, vector<32x128xf32>
    %cst = arith.constant dense<0.000000e+00> : vector<16x128xf32>
    %4 = tpu.matmul %2, %3, %cst {dimension_numbers = #tpu.dot_dimension_numbers<[1], [0], [0], [1], [0, 0, 1, 1], [], []>} : vector<16x32xf32>, vector<32x128xf32>, vector<16x128xf32> -> vector<16x128xf32>
    %c0_5 = arith.constant 0 : index
    %c0_6 = arith.constant 0 : index
    %5 = vector.load %arg4[%c0_5, %c0_6] : memref<1x128xf32, #tpu.memory_space<vmem>>, vector<1x128xf32>
    %6 = vector.broadcast %5 : vector<1x128xf32> to vector<16x128xf32>
    %7 = arith.addf %4, %6 : vector<16x128xf32>
    %cst_7 = arith.constant 0.000000e+00 : f32
    %8 = vector.broadcast %cst_7 : f32 to vector<16x128xf32>
    %9 = arith.maximumf %7, %8 : vector<16x128xf32>
    %c0_8 = arith.constant 0 : index
    %c0_9 = arith.constant 0 : index
    %10 = vector.load %arg5[%c0_8, %c0_9] : memref<128x128xf32, #tpu.memory_space<vmem>>, vector<128x128xf32>
    %cst_10 = arith.constant dense<0.000000e+00> : vector<16x128xf32>
    %11 = tpu.matmul %9, %10, %cst_10 {dimension_numbers = #tpu.dot_dimension_numbers<[1], [0], [0], [1], [0, 0, 1, 1], [], []>} : vector<16x128xf32>, vector<128x128xf32>, vector<16x128xf32> -> vector<16x128xf32>
    %c0_11 = arith.constant 0 : index
    %c0_12 = arith.constant 0 : index
    %12 = vector.load %arg6[%c0_11, %c0_12] : memref<1x128xf32, #tpu.memory_space<vmem>>, vector<1x128xf32>
    %13 = vector.broadcast %12 : vector<1x128xf32> to vector<16x128xf32>
    %14 = arith.addf %11, %13 : vector<16x128xf32>
    %cst_13 = arith.constant 0.000000e+00 : f32
    %15 = vector.broadcast %cst_13 : f32 to vector<16x128xf32>
    %16 = arith.maximumf %14, %15 : vector<16x128xf32>
    %c0_14 = arith.constant 0 : index
    %c0_15 = arith.constant 0 : index
    %17 = vector.load %arg7[%c0_14, %c0_15] : memref<128x32xf32, #tpu.memory_space<vmem>>, vector<128x32xf32>
    %cst_16 = arith.constant dense<0.000000e+00> : vector<16x32xf32>
    %18 = tpu.matmul %16, %17, %cst_16 {dimension_numbers = #tpu.dot_dimension_numbers<[1], [0], [0], [1], [0, 0, 1, 1], [], []>} : vector<16x128xf32>, vector<128x32xf32>, vector<16x32xf32> -> vector<16x32xf32>
    %c0_17 = arith.constant 0 : index
    %c0_18 = arith.constant 0 : index
    %19 = vector.load %arg8[%c0_17, %c0_18] : memref<1x32xf32, #tpu.memory_space<vmem>>, vector<1x32xf32>
    %20 = vector.broadcast %19 : vector<1x32xf32> to vector<16x32xf32>
    %21 = arith.addf %18, %20 : vector<16x32xf32>
    %c0_19 = arith.constant 0 : index
    %c0_20 = arith.constant 0 : index
    %22 = vector.load %arg9[%c0_19, %c0_20] : memref<16x32xf32, #tpu.memory_space<vmem>>, vector<16x32xf32>
    tpu.vector_store %arg9[%c0_19, %c0_20], %21 {strides = array<i32>} : memref<16x32xf32, #tpu.memory_space<vmem>>, vector<16x32xf32>,
    return
  }
  func.func @transform_0(%arg0: i32) -> (i32, i32) {
    %c0_i32 = arith.constant 0 : i32
    %c0_i32_0 = arith.constant 0 : i32
    return %arg0, %c0_i32 : i32, i32
  }
  func.func @transform_1(%arg0: i32) -> (i32, i32) {
    %c0_i32 = arith.constant 0 : i32
    %c0_i32_0 = arith.constant 0 : i32
    return %arg0, %c0_i32 : i32, i32
  }
  func.func @transform_2(%arg0: i32) -> (i32, i32) {
    %c0_i32 = arith.constant 0 : i32
    %c0_i32_0 = arith.constant 0 : i32
    %c0_i32_1 = arith.constant 0 : i32
    return %c0_i32, %c0_i32_0 : i32, i32
  }
  func.func @transform_3(%arg0: i32) -> (i32, i32) {
    %c0_i32 = arith.constant 0 : i32
    %c0_i32_0 = arith.constant 0 : i32
    %c0_i32_1 = arith.constant 0 : i32
    return %c0_i32, %c0_i32_0 : i32, i32
  }
  func.func @transform_4(%arg0: i32) -> (i32, i32) {
    %c0_i32 = arith.constant 0 : i32
    %c0_i32_0 = arith.constant 0 : i32
    %c0_i32_1 = arith.constant 0 : i32
    return %c0_i32, %c0_i32_0 : i32, i32
  }
  func.func @transform_5(%arg0: i32) -> (i32, i32) {
    %c0_i32 = arith.constant 0 : i32
    %c0_i32_0 = arith.constant 0 : i32
    %c0_i32_1 = arith.constant 0 : i32
    return %c0_i32, %c0_i32_0 : i32, i32
  }
  func.func @transform_6(%arg0: i32) -> (i32, i32) {
    %c0_i32 = arith.constant 0 : i32
    %c0_i32_0 = arith.constant 0 : i32
    %c0_i32_1 = arith.constant 0 : i32
    return %c0_i32, %c0_i32_0 : i32, i32
  }
  func.func @transform_7(%arg0: i32) -> (i32, i32) {
    %c0_i32 = arith.constant 0 : i32
    %c0_i32_0 = arith.constant 0 : i32
    %c0_i32_1 = arith.constant 0 : i32
    return %c0_i32, %c0_i32_0 : i32, i32
  }
  func.func @transform_8(%arg0: i32) -> (i32, i32) {
    %c0_i32 = arith.constant 0 : i32
    %c0_i32_0 = arith.constant 0 : i32
    return %arg0, %c0_i32 : i32, i32
  }
}

</mosaic_0001>

<llo_original>
// kernel: tpu_custom_call.1
$region0: #{tpu_custom_call.1}
  #allocation0 [shape = 'u32[]', space=smem, size = 0x4, offset = 0x4, fixed_abs, tag = 'smem constant byte address 0x4 - core index']
  #allocation1 [shape = 'u32[144,128]{1,0:T(1,128)}', space=vmem, size = 0x12000, scoped, tag = 'internal scratch']
  %s0 = inlined_call_operand.hbm [shape: f32[16,32], index: 0, kind: input, shape index: {}]
  %s1 = inlined_call_operand.hbm [shape: f32[16,32], index: 1, kind: input, shape index: {}]
  %s2 = inlined_call_operand.hbm [shape: f32[32,128], index: 2, kind: input, shape index: {}]
  %s3 = inlined_call_operand.hbm [shape: f32[1,128], index: 3, kind: input, shape index: {}]
  %s4 = inlined_call_operand.hbm [shape: f32[128,128], index: 4, kind: input, shape index: {}]
  %s5 = inlined_call_operand.hbm [shape: f32[1,128], index: 5, kind: input, shape index: {}]
  %s6 = inlined_call_operand.hbm [shape: f32[128,32], index: 6, kind: input, shape index: {}]
  %s7 = inlined_call_operand.hbm [shape: f32[1,32], index: 7, kind: input, shape index: {}]
  %s8 = inlined_call_operand.hbm [shape: f32[16,32], index: 8, kind: output, shape index: {}]
  %s9 = sld [smem:[#allocation0]]
  $region74: #{tpu_custom_call.1} parent=0
    _
  %s11 = ssub.s32 1, %s9
  %s12 = scalar_select 0, %s11, %s9
  $region1: #{tpu_custom_call.1} parent=0
    #allocation2 [shape = 'u8[8192]{0}', space=vmem, size = 0x2000, scoped, tag = 'input window, operand 0, single buffered']
    #allocation3 [shape = 's32[1]{0}', space=sflag, size = 0x4, scoped, tag = 'scoped memory for tpu_custom_call.1']
    #allocation4 [shape = 's32[1]{0}', space=sflag, size = 0x4, scoped, tag = 'scoped memory for tpu_custom_call.1']
    #allocation5 [shape = 'u8[8192]{0}', space=vmem, size = 0x2000, scoped, tag = 'input window, operand 1, single buffered']
    #allocation6 [shape = 's32[1]{0}', space=sflag, size = 0x4, scoped, tag = 'scoped memory for tpu_custom_call.1']
    #allocation7 [shape = 'u8[16384]{0}', space=vmem, size = 0x4000, scoped, tag = 'input window, operand 2, single buffered']
    #allocation8 [shape = 'u8[512]{0}', space=vmem, size = 0x400, scoped, tag = 'input window, operand 3, single buffered']
    #allocation9 [shape = 's32[1]{0}', space=sflag, size = 0x4, scoped, tag = 'scoped memory for tpu_custom_call.1']
    #allocation10 [shape = 'u8[65536]{0}', space=vmem, size = 0x10000, scoped, tag = 'input window, operand 4, single buffered']
    #allocation11 [shape = 'u8[512]{0}', space=vmem, size = 0x400, scoped, tag = 'input window, operand 5, single buffered']
    #allocation12 [shape = 's32[1]{0}', space=sflag, size = 0x4, scoped, tag = 'scoped memory for tpu_custom_call.1']
    #allocation13 [shape = 'u8[65536]{0}', space=vmem, size = 0x10000, scoped, tag = 'input window, operand 6, single buffered']
    #allocation14 [shape = 'u8[512]{0}', space=vmem, size = 0x400, scoped, tag = 'input window, operand 7, single buffered']
    #allocation15 [shape = 's32[1]{0}', space=sflag, size = 0x4, scoped, tag = 'scoped memory for tpu_custom_call.1']
    #allocation16 [shape = 'u8[8192]{0}', space=vmem, size = 0x2000, scoped, tag = 'output window, operand 0, single buffered']
    %13 = vsyncpa [#allocation3], 0
    %14 = vsyncpa [#allocation6], 0
    %15 = vsyncpa [#allocation9], 0
    %16 = vsyncpa [#allocation12], 0
    %17 = vsyncpa [#allocation15], 0
    %18 = vsyncpa [#allocation4], 0
    // Predicated region
    $region2: #{tpu_custom_call.1} parent=1 // pred_check
      _
    $region3: #{tpu_custom_call.1} parent=1 // pred_check_branch
      %20 = sbr.rel (0) target = $region5
    $region4: #{tpu_custom_call.1} parent=1 // pred_region
      %s22 = ssub.s32 256, 256
      %23 = vsyncadd [#allocation3], %s22
      %s24 = sshll.u32 [#allocation2], 4
      %s25 = int_to_ptr.vmem [resolvable:$true] %s24
      %30 = dma.hbm_to_vmem [thread:$0]  %s0, 256, %s25, [#allocation3], 128, 128, 8
    $region5: #{tpu_custom_call.1} parent=1 // pred_fallthru
      _
    // Predicated region
    $region6: #{tpu_custom_call.1} parent=1 // pred_check
      _
    $region7: #{tpu_custom_call.1} parent=1 // pred_check_branch
      %32 = sbr.rel (0) target = $region9
    $region8: #{tpu_custom_call.1} parent=1 // pred_region
      %s34 = ssub.s32 256, 256
      %35 = vsyncadd [#allocation6], %s34
      %s36 = sshll.u32 [#allocation5], 4
      %s37 = int_to_ptr.vmem [resolvable:$true] %s36
      %42 = dma.hbm_to_vmem [thread:$0]  %s1, 256, %s37, [#allocation6], 128, 128, 8
    $region9: #{tpu_custom_call.1} parent=1 // pred_fallthru
      _
    // Predicated region
    $region10: #{tpu_custom_call.1} parent=1 // pred_check
      _
    $region11: #{tpu_custom_call.1} parent=1 // pred_check_branch
      %44 = sbr.rel (0) target = $region13
    $region12: #{tpu_custom_call.1} parent=1 // pred_region
      %s46 = ssub.s32 512, 512
      %47 = vsyncadd [#allocation6], %s46
      %s48 = sshll.u32 [#allocation7], 4
      %s49 = int_to_ptr.vmem [resolvable:$true] %s48
      %54 = dma.hbm_to_vmem [thread:$0]  %s2, 512, %s49, [#allocation6], 128, 128, 8
    $region13: #{tpu_custom_call.1} parent=1 // pred_fallthru
      _
    // Predicated region
    $region14: #{tpu_custom_call.1} parent=1 // pred_check
      _
    $region15: #{tpu_custom_call.1} parent=1 // pred_check_branch
      %56 = sbr.rel (0) target = $region17
    $region16: #{tpu_custom_call.1} parent=1 // pred_region
      %s58 = ssub.s32 16, 16
      %59 = vsyncadd [#allocation9], %s58
      %s61 = sshll.u32 [#allocation8], 4
      %s62 = int_to_ptr.vmem [resolvable:$true] %s61
      %64 = dma.hbm_to_vmem [thread:$0]  %s3, 16, %s62, [#allocation9]
    $region17: #{tpu_custom_call.1} parent=1 // pred_fallthru
      _
    // Predicated region
    $region18: #{tpu_custom_call.1} parent=1 // pred_check
      _
    $region19: #{tpu_custom_call.1} parent=1 // pred_check_branch
      %66 = sbr.rel (0) target = $region21
    $region20: #{tpu_custom_call.1} parent=1 // pred_region
      %s68 = ssub.s32 2048, 2048
      %69 = vsyncadd [#allocation9], %s68
      %s70 = sshll.u32 [#allocation10], 4
      %s71 = int_to_ptr.vmem [resolvable:$true] %s70
      %76 = dma.hbm_to_vmem [thread:$0]  %s4, 2048, %s71, [#allocation9], 128, 128, 8
    $region21: #{tpu_custom_call.1} parent=1 // pred_fallthru
      _
    // Predicated region
    $region22: #{tpu_custom_call.1} parent=1 // pred_check
      _
    $region23: #{tpu_custom_call.1} parent=1 // pred_check_branch
      %78 = sbr.rel (0) target = $region25
    $region24: #{tpu_custom_call.1} parent=1 // pred_region
      %s80 = ssub.s32 16, 16
      %81 = vsyncadd [#allocation12], %s80
      %s83 = sshll.u32 [#allocation11], 4
      %s84 = int_to_ptr.vmem [resolvable:$true] %s83
      %86 = dma.hbm_to_vmem [thread:$0]  %s5, 16, %s84, [#allocation12]
    $region25: #{tpu_custom_call.1} parent=1 // pred_fallthru
      _
    // Predicated region
    $region26: #{tpu_custom_call.1} parent=1 // pred_check
      _
    $region27: #{tpu_custom_call.1} parent=1 // pred_check_branch
      %88 = sbr.rel (0) target = $region29
    $region28: #{tpu_custom_call.1} parent=1 // pred_region
      %s90 = ssub.s32 2048, 2048
      %91 = vsyncadd [#allocation12], %s90
      %s92 = sshll.u32 [#allocation13], 4
      %s93 = int_to_ptr.vmem [resolvable:$true] %s92
      %98 = dma.hbm_to_vmem [thread:$0]  %s6, 2048, %s93, [#allocation12], 128, 128, 8
    $region29: #{tpu_custom_call.1} parent=1 // pred_fallthru
      _
    // Predicated region
    $region30: #{tpu_custom_call.1} parent=1 // pred_check
      _
    $region31: #{tpu_custom_call.1} parent=1 // pred_check_branch
      %100 = sbr.rel (0) target = $region33
    $region32: #{tpu_custom_call.1} parent=1 // pred_region
      %s102 = ssub.s32 16, 16
      %103 = vsyncadd [#allocation15], %s102
      %s105 = sshll.u32 [#allocation14], 4
      %s106 = int_to_ptr.vmem [resolvable:$true] %s105
      %108 = dma.hbm_to_vmem [thread:$0]  %s7, 16, %s106, [#allocation15]
    $region33: #{tpu_custom_call.1} parent=1 // pred_fallthru
      _
    // Predicated region
    $region34: #{tpu_custom_call.1} parent=1 // pred_check
      _
    $region35: #{tpu_custom_call.1} parent=1 // pred_check_branch
      %110 = sbr.rel (0) target = $region37
    $region36: #{tpu_custom_call.1} parent=1 // pred_region
      %111 = dma.done [#allocation3], 256
    $region37: #{tpu_custom_call.1} parent=1 // pred_fallthru
      _
    // Predicated region
    $region38: #{tpu_custom_call.1} parent=1 // pred_check
      _
    $region39: #{tpu_custom_call.1} parent=1 // pred_check_branch
      %113 = sbr.rel (0) target = $region41
    $region40: #{tpu_custom_call.1} parent=1 // pred_region
      %114 = dma.done [#allocation6], 256
    $region41: #{tpu_custom_call.1} parent=1 // pred_fallthru
      _
    // Predicated region
    $region42: #{tpu_custom_call.1} parent=1 // pred_check
      _
    $region43: #{tpu_custom_call.1} parent=1 // pred_check_branch
      %116 = sbr.rel (0) target = $region45
    $region44: #{tpu_custom_call.1} parent=1 // pred_region
      %117 = dma.done [#allocation6], 512
    $region45: #{tpu_custom_call.1} parent=1 // pred_fallthru
      _
    // Predicated region
    $region46: #{tpu_custom_call.1} parent=1 // pred_check
      _
    $region47: #{tpu_custom_call.1} parent=1 // pred_check_branch
      %119 = sbr.rel (0) target = $region49
    $region48: #{tpu_custom_call.1} parent=1 // pred_region
      %120 = dma.done [#allocation9], 16
    $region49: #{tpu_custom_call.1} parent=1 // pred_fallthru
      _
    // Predicated region
    $region50: #{tpu_custom_call.1} parent=1 // pred_check
      _
    $region51: #{tpu_custom_call.1} parent=1 // pred_check_branch
      %122 = sbr.rel (0) target = $region53
    $region52: #{tpu_custom_call.1} parent=1 // pred_region
      %123 = dma.done [#allocation9], 2048
    $region53: #{tpu_custom_call.1} parent=1 // pred_fallthru
      _
    // Predicated region
    $region54: #{tpu_custom_call.1} parent=1 // pred_check
      _
    $region55: #{tpu_custom_call.1} parent=1 // pred_check_branch
      %125 = sbr.rel (0) target = $region57
    $region56: #{tpu_custom_call.1} parent=1 // pred_region
      %126 = dma.done [#allocation12], 16
    $region57: #{tpu_custom_call.1} parent=1 // pred_fallthru
      _
    // Predicated region
    $region58: #{tpu_custom_call.1} parent=1 // pred_check
      _
    $region59: #{tpu_custom_call.1} parent=1 // pred_check_branch
      %128 = sbr.rel (0) target = $region61
    $region60: #{tpu_custom_call.1} parent=1 // pred_region
      %129 = dma.done [#allocation12], 2048
    $region61: #{tpu_custom_call.1} parent=1 // pred_fallthru
      _
    // Predicated region
    $region62: #{tpu_custom_call.1} parent=1 // pred_check
      _
    $region63: #{tpu_custom_call.1} parent=1 // pred_check_branch
      %131 = sbr.rel (0) target = $region65
    $region64: #{tpu_custom_call.1} parent=1 // pred_region
      %132 = dma.done [#allocation15], 16
    $region65: #{tpu_custom_call.1} parent=1 // pred_fallthru
      _
    %v133 = vld [vmem:[#allocation2] sm:$0xff]
    %v134 = vld [vmem:[#allocation2 + $0x8] sm:$0xff]
    %v135 = vld [vmem:[#allocation5] sm:$0xff]
    %v136 = vld [vmem:[#allocation5 + $0x8] sm:$0xff]
    %v137 = vadd.f32 %v133, %v135
    %v138 = vadd.f32 %v134, %v136
    %v139 = vld [vmem:[#allocation7] sm:$0xff]
    %v140 = vld [vmem:[#allocation7 + $0x8] sm:$0xff]
    %v141 = vld [vmem:[#allocation7 + $0x10] sm:$0xff]
    %v142 = vld [vmem:[#allocation7 + $0x18] sm:$0xff]
    %v143 = vld [vmem:[#allocation8] sm:$0x1]
    %v145 = vlaneseq
    %v146 = vshrl.u32 %v145, 7
    %v147 = vsub.s32 0, %v146
    %v148 = vrot.slane %v143, %v147
    %vm150 = vcmask 261120
    %v152 = vsel %vm150, %v137, 0
    %v155 = vsel %vm150, %v138, 0
    %157 = vmatprep.subr.mxu0 0.0
    %158 = vmatpush1.msra.mxu0 %v139
    %159 = vmatprep.subr.mxu0 0.0
    %160 = vmatpush1.msra.mxu0 %v140
    %161 = vmatprep.subr.mxu0 0.0
    %162 = vmatpush1.msra.mxu0 %v141
    %163 = vmatprep.subr.mxu0 0.0
    %164 = vmatpush1.msra.mxu0 %v142
    %165 = vmatprep.subr.mxu0 0.0
    %166 = vmatpush1.msra.mxu0 0.0
    %167 = vmatprep.subr.mxu0 0.0
    %168 = vmatpush1.msra.mxu0 0.0
    %169 = vmatprep.subr.mxu0 0.0
    %170 = vmatpush1.msra.mxu0 0.0
    %171 = vmatprep.subr.mxu0 0.0
    %172 = vmatpush1.msra.mxu0 0.0
    %173 = vmatprep.subr.mxu0 0.0
    %174 = vmatpush1.msra.mxu0 0.0
    %175 = vmatprep.subr.mxu0 0.0
    %176 = vmatpush1.msra.mxu0 0.0
    %177 = vmatprep.subr.mxu0 0.0
    %178 = vmatpush1.msra.mxu0 0.0
    %179 = vmatprep.subr.mxu0 0.0
    %180 = vmatpush1.msra.mxu0 0.0
    %181 = vmatprep.subr.mxu0 0.0
    %182 = vmatpush1.msra.mxu0 0.0
    %183 = vmatprep.subr.mxu0 0.0
    %184 = vmatpush1.msra.mxu0 0.0
    %185 = vmatprep.subr.mxu0 0.0
    %186 = vmatpush1.msra.mxu0 0.0
    %187 = vmatprep.subr.mxu0 0.0
    %188 = vmatpush1.msra.mxu0 0.0
    %189 = vmatprep.subr.mxu0 0.0
    %190 = vmatpush1.msra.mxu0 0.0
    %191 = vmatprep.subr.mxu0 0.0
    %192 = vmatpush1.msra.mxu0 0.0
    %193 = vmatprep.subr.mxu0 0.0
    %194 = vmatpush1.msra.mxu0 0.0
    %195 = vmatprep.subr.mxu0 0.0
    %196 = vmatpush1.msra.mxu0 0.0
    %197 = vmatprep.subr.mxu0 0.0
    %198 = vmatpush1.msra.mxu0 0.0
    %199 = vmatprep.subr.mxu0 0.0
    %200 = vmatpush1.msra.mxu0 0.0
    %201 = vmatprep.subr.mxu0 0.0
    %202 = vmatpush1.msra.mxu0 0.0
    %203 = vmatprep.subr.mxu0 0.0
    %204 = vmatpush1.msra.mxu0 0.0
    %205 = vmatprep.subr.mxu0 0.0
    %206 = vmatpush1.msra.mxu0 0.0
    %207 = vmatprep.subr.mxu0 0.0
    %208 = vmatpush1.msra.mxu0 0.0
    %209 = vmatprep.subr.mxu0 0.0
    %210 = vmatpush1.msra.mxu0 0.0
    %211 = vmatprep.subr.mxu0 0.0
    %212 = vmatpush1.msra.mxu0 0.0
    %213 = vmatprep.subr.mxu0 0.0
    %214 = vmatpush1.msra.mxu0 0.0
    %215 = vmatprep.subr.mxu0 0.0
    %216 = vmatpush1.msra.mxu0 0.0
    %217 = vmatprep.subr.mxu0 0.0
    %218 = vmatpush1.msra.mxu0 0.0
    %219 = vmatprep.subr.mxu0 0.0
    %220 = vmatpush1.msra.mxu0 0.0
    %221 = vmatprep.mubr.f32.mxu0 0.0
    %222 = vmatmul.mubr.f32.gmra.mrb[0].mxu0 %v152
    %v223 = vpop.f32.mrb[0].mxu0
    %v224 = vadd.f32 %v148, %v223
    %v225 = vpop.f32.mrb[0].mxu0
    %226 = vmatprep.mubr.f32.mxu0 0.0
    %227 = vmatmul.mubr.f32.gmra.mrb[0].mxu0 %v155
    %v228 = vpop.f32.mrb[0].mxu0
    %v229 = vadd.f32 %v148, %v228
    %v230 = vpop.f32.mrb[0].mxu0
    %231 = vdwg.mxu0
    %v232 = vmax.f32 %v224, 0.0
    %v233 = vmax.f32 %v229, 0.0
    %v234 = vld [vmem:[#allocation10] sm:$0xff]
    %v235 = vld [vmem:[#allocation10 + $0x8] sm:$0xff]
    %v236 = vld [vmem:[#allocation10 + $0x10] sm:$0xff]
    %v237 = vld [vmem:[#allocation10 + $0x18] sm:$0xff]
    %v238 = vld [vmem:[#allocation10 + $0x20] sm:$0xff]
    %v239 = vld [vmem:[#allocation10 + $0x28] sm:$0xff]
    %v240 = vld [vmem:[#allocation10 + $0x30] sm:$0xff]
    %v241 = vld [vmem:[#allocation10 + $0x38] sm:$0xff]
    %v242 = vld [vmem:[#allocation10 + $0x40] sm:$0xff]
    %v243 = vld [vmem:[#allocation10 + $0x48] sm:$0xff]
    %v244 = vld [vmem:[#allocation10 + $0x50] sm:$0xff]
    %v245 = vld [vmem:[#allocation10 + $0x58] sm:$0xff]
    %v246 = vld [vmem:[#allocation10 + $0x60] sm:$0xff]
    %v247 = vld [vmem:[#allocation10 + $0x68] sm:$0xff]
    %v248 = vld [vmem:[#allocation10 + $0x70] sm:$0xff]
    %v249 = vld [vmem:[#allocation10 + $0x78] sm:$0xff]
    %v250 = vld [vmem:[#allocation11] sm:$0x1]
    %v252 = vlaneseq
    %v253 = vshrl.u32 %v252, 7
    %v254 = vsub.s32 0, %v253
    %v255 = vrot.slane %v250, %v254
    %257 = vmatprep.subr.mxu0 0.0
    %258 = vmatpush1.msra.mxu0 %v234
    %259 = vmatprep.subr.mxu0 0.0
    %260 = vmatpush1.msra.mxu0 %v235
    %261 = vmatprep.subr.mxu0 0.0
    %262 = vmatpush1.msra.mxu0 %v236
    %263 = vmatprep.subr.mxu0 0.0
    %264 = vmatpush1.msra.mxu0 %v237
    %265 = vmatprep.subr.mxu0 0.0
    %266 = vmatpush1.msra.mxu0 %v238
    %267 = vmatprep.subr.mxu0 0.0
    %268 = vmatpush1.msra.mxu0 %v239
    %269 = vmatprep.subr.mxu0 0.0
    %270 = vmatpush1.msra.mxu0 %v240
    %271 = vmatprep.subr.mxu0 0.0
    %272 = vmatpush1.msra.mxu0 %v241
    %273 = vmatprep.subr.mxu0 0.0
    %274 = vmatpush1.msra.mxu0 %v242
    %275 = vmatprep.subr.mxu0 0.0
    %276 = vmatpush1.msra.mxu0 %v243
    %277 = vmatprep.subr.mxu0 0.0
    %278 = vmatpush1.msra.mxu0 %v244
    %279 = vmatprep.subr.mxu0 0.0
    %280 = vmatpush1.msra.mxu0 %v245
    %281 = vmatprep.subr.mxu0 0.0
    %282 = vmatpush1.msra.mxu0 %v246
    %283 = vmatprep.subr.mxu0 0.0
    %284 = vmatpush1.msra.mxu0 %v247
    %285 = vmatprep.subr.mxu0 0.0
    %286 = vmatpush1.msra.mxu0 %v248
    %287 = vmatprep.subr.mxu0 0.0
    %288 = vmatpush1.msra.mxu0 %v249
    %289 = vmatprep.subr.mxu0 0.0
    %290 = vmatpush1.msra.mxu0 0.0
    %291 = vmatprep.subr.mxu0 0.0
    %292 = vmatpush1.msra.mxu0 0.0
    %293 = vmatprep.subr.mxu0 0.0
    %294 = vmatpush1.msra.mxu0 0.0
    %295 = vmatprep.subr.mxu0 0.0
    %296 = vmatpush1.msra.mxu0 0.0
    %297 = vmatprep.subr.mxu0 0.0
    %298 = vmatpush1.msra.mxu0 0.0
    %299 = vmatprep.subr.mxu0 0.0
    %300 = vmatpush1.msra.mxu0 0.0
    %301 = vmatprep.subr.mxu0 0.0
    %302 = vmatpush1.msra.mxu0 0.0
    %303 = vmatprep.subr.mxu0 0.0
    %304 = vmatpush1.msra.mxu0 0.0
    %305 = vmatprep.subr.mxu0 0.0
    %306 = vmatpush1.msra.mxu0 0.0
    %307 = vmatprep.subr.mxu0 0.0
    %308 = vmatpush1.msra.mxu0 0.0
    %309 = vmatprep.subr.mxu0 0.0
    %310 = vmatpush1.msra.mxu0 0.0
    %311 = vmatprep.subr.mxu0 0.0
    %312 = vmatpush1.msra.mxu0 0.0
    %313 = vmatprep.subr.mxu0 0.0
    %314 = vmatpush1.msra.mxu0 0.0
    %315 = vmatprep.subr.mxu0 0.0
    %316 = vmatpush1.msra.mxu0 0.0
    %317 = vmatprep.subr.mxu0 0.0
    %318 = vmatpush1.msra.mxu0 0.0
    %319 = vmatprep.subr.mxu0 0.0
    %320 = vmatpush1.msra.mxu0 0.0
    %321 = vmatprep.mubr.f32.mxu0 0.0
    %322 = vmatmul.mubr.f32.gmra.mrb[0].mxu0 %v232
    %v323 = vpop.f32.mrb[0].mxu0
    %v324 = vadd.f32 %v255, %v323
    %v325 = vpop.f32.mrb[0].mxu0
    %326 = vmatprep.mubr.f32.mxu0 0.0
    %327 = vmatmul.mubr.f32.gmra.mrb[0].mxu0 %v233
    %v328 = vpop.f32.mrb[0].mxu0
    %v329 = vadd.f32 %v255, %v328
    %v330 = vpop.f32.mrb[0].mxu0
    %331 = vdwg.mxu0
    %v332 = vmax.f32 %v324, 0.0
    %v333 = vmax.f32 %v329, 0.0
    %v334 = vld [vmem:[#allocation13] sm:$0xff]
    %v335 = vld [vmem:[#allocation13 + $0x8] sm:$0xff]
    %v336 = vld [vmem:[#allocation13 + $0x10] sm:$0xff]
    %v337 = vld [vmem:[#allocation13 + $0x18] sm:$0xff]
    %v338 = vld [vmem:[#allocation13 + $0x20] sm:$0xff]
    %v339 = vld [vmem:[#allocation13 + $0x28] sm:$0xff]
    %v340 = vld [vmem:[#allocation13 + $0x30] sm:$0xff]
    %v341 = vld [vmem:[#allocation13 + $0x38] sm:$0xff]
    %v342 = vld [vmem:[#allocation13 + $0x40] sm:$0xff]
    %v343 = vld [vmem:[#allocation13 + $0x48] sm:$0xff]
    %v344 = vld [vmem:[#allocation13 + $0x50] sm:$0xff]
    %v345 = vld [vmem:[#allocation13 + $0x58] sm:$0xff]
    %v346 = vld [vmem:[#allocation13 + $0x60] sm:$0xff]
    %v347 = vld [vmem:[#allocation13 + $0x68] sm:$0xff]
    %v348 = vld [vmem:[#allocation13 + $0x70] sm:$0xff]
    %v349 = vld [vmem:[#allocation13 + $0x78] sm:$0xff]
    %v350 = vld [vmem:[#allocation14] sm:$0x1]
    %v352 = vlaneseq
    %v353 = vshrl.u32 %v352, 7
    %v354 = vsub.s32 0, %v353
    %v355 = vrot.slane %v350, %v354
    %357 = vmatprep.subr.mxu0 0.0
    %358 = vmatpush1.msra.mxu0 %v334
    %359 = vmatprep.subr.mxu0 0.0
    %360 = vmatpush1.msra.mxu0 %v335
    %361 = vmatprep.subr.mxu0 0.0
    %362 = vmatpush1.msra.mxu0 %v336
    %363 = vmatprep.subr.mxu0 0.0
    %364 = vmatpush1.msra.mxu0 %v337
    %365 = vmatprep.subr.mxu0 0.0
    %366 = vmatpush1.msra.mxu0 %v338
    %367 = vmatprep.subr.mxu0 0.0
    %368 = vmatpush1.msra.mxu0 %v339
    %369 = vmatprep.subr.mxu0 0.0
    %370 = vmatpush1.msra.mxu0 %v340
    %371 = vmatprep.subr.mxu0 0.0
    %372 = vmatpush1.msra.mxu0 %v341
    %373 = vmatprep.subr.mxu0 0.0
    %374 = vmatpush1.msra.mxu0 %v342
    %375 = vmatprep.subr.mxu0 0.0
    %376 = vmatpush1.msra.mxu0 %v343
    %377 = vmatprep.subr.mxu0 0.0
    %378 = vmatpush1.msra.mxu0 %v344
    %379 = vmatprep.subr.mxu0 0.0
    %380 = vmatpush1.msra.mxu0 %v345
    %381 = vmatprep.subr.mxu0 0.0
    %382 = vmatpush1.msra.mxu0 %v346
    %383 = vmatprep.subr.mxu0 0.0
    %384 = vmatpush1.msra.mxu0 %v347
    %385 = vmatprep.subr.mxu0 0.0
    %386 = vmatpush1.msra.mxu0 %v348
    %387 = vmatprep.subr.mxu0 0.0
    %388 = vmatpush1.msra.mxu0 %v349
    %389 = vmatprep.subr.mxu0 0.0
    %390 = vmatpush1.msra.mxu0 0.0
    %391 = vmatprep.subr.mxu0 0.0
    %392 = vmatpush1.msra.mxu0 0.0
    %393 = vmatprep.subr.mxu0 0.0
    %394 = vmatpush1.msra.mxu0 0.0
    %395 = vmatprep.subr.mxu0 0.0
    %396 = vmatpush1.msra.mxu0 0.0
    %397 = vmatprep.subr.mxu0 0.0
    %398 = vmatpush1.msra.mxu0 0.0
    %399 = vmatprep.subr.mxu0 0.0
    %400 = vmatpush1.msra.mxu0 0.0
    %401 = vmatprep.subr.mxu0 0.0
    %402 = vmatpush1.msra.mxu0 0.0
    %403 = vmatprep.subr.mxu0 0.0
    %404 = vmatpush1.msra.mxu0 0.0
    %405 = vmatprep.subr.mxu0 0.0
    %406 = vmatpush1.msra.mxu0 0.0
    %407 = vmatprep.subr.mxu0 0.0
    %408 = vmatpush1.msra.mxu0 0.0
    %409 = vmatprep.subr.mxu0 0.0
    %410 = vmatpush1.msra.mxu0 0.0
    %411 = vmatprep.subr.mxu0 0.0
    %412 = vmatpush1.msra.mxu0 0.0
    %413 = vmatprep.subr.mxu0 0.0
    %414 = vmatpush1.msra.mxu0 0.0
    %415 = vmatprep.subr.mxu0 0.0
    %416 = vmatpush1.msra.mxu0 0.0
    %417 = vmatprep.subr.mxu0 0.0
    %418 = vmatpush1.msra.mxu0 0.0
    %419 = vmatprep.subr.mxu0 0.0
    %420 = vmatpush1.msra.mxu0 0.0
    %421 = vmatprep.mubr.f32.mxu0 0.0
    %422 = vmatmul.mubr.f32.gmra.mrb[0].mxu0 %v332
    %v423 = vpop.f32.mrb[0].mxu0
    %v424 = vadd.f32 %v355, %v423
    %v425 = vpop.f32.mrb[0].mxu0
    %426 = vmatprep.mubr.f32.mxu0 0.0
    %427 = vmatmul.mubr.f32.gmra.mrb[0].mxu0 %v333
    %v428 = vpop.f32.mrb[0].mxu0
    %v429 = vadd.f32 %v355, %v428
    %v430 = vpop.f32.mrb[0].mxu0
    %431 = vdwg.mxu0
    %432 = vst.msk [vmem:[#allocation16] sm:$0xff] %vm150, %v424
    %433 = vst.msk [vmem:[#allocation16 + $0x8] sm:$0xff] %vm150, %v429
    // Predicated region
    $region66: #{tpu_custom_call.1} parent=1 // pred_check
      _
    $region67: #{tpu_custom_call.1} parent=1 // pred_check_branch
      %435 = sbr.rel (0) target = $region69
    $region68: #{tpu_custom_call.1} parent=1 // pred_region
      %s437 = ssub.s32 256, 256
      %438 = vsyncadd [#allocation4], %s437
      %s439 = sshll.u32 [#allocation16], 4
      %s440 = int_to_ptr.vmem [resolvable:$true] %s439
      %445 = dma.vmem_to_hbm [thread:$0]  %s440, 256, %s8, [#allocation4], 128, 128, 8
    $region69: #{tpu_custom_call.1} parent=1 // pred_fallthru
      _
    // Predicated region
    $region70: #{tpu_custom_call.1} parent=1 // pred_check
      _
    $region71: #{tpu_custom_call.1} parent=1 // pred_check_branch
      %447 = sbr.rel (0) target = $region73
    $region72: #{tpu_custom_call.1} parent=1 // pred_region
      %448 = dma.done [#allocation4], 256
    $region73: #{tpu_custom_call.1} parent=1 // pred_fallthru
      _
    %449 = vsyncpa [#allocation3], 1
    %450 = vsyncpa [#allocation6], 1
    %451 = vsyncpa [#allocation9], 1
    %452 = vsyncpa [#allocation12], 1
    %453 = vsyncpa [#allocation15], 1
    %454 = vsyncpa [#allocation4], 1

</llo_original>
